<compile_context>
chip_gen: v7x
topology: tpu7x:2x2x1
jax: 0.10.0
libtpu: 0.0.40
codegen_flags: <defaults>
</compile_context>

<pallas_src>
import functools

import jax
import jax.numpy as jnp
from jax.experimental import pallas as pl
from jax.experimental.pallas import tpu as pltpu

F_PAD = 128      # lane-dense feature width (every feature axis padded to 128 lanes)
_LN_EPS = 1e-5


def _round_up(x, m):
    return (x + m - 1) // m * m


def _fused_sage_kernel(*refs, n_dst, ns_pad, f_out_real):
    """All SAGE layers fused in one kernel body (loop unrolled at trace time).

    refs = (h0, a_0..a_{L-1}, W_all, bias_all, gamma_all, beta_all, out, h_scratch)
      h0        : (ns_pad[0], F_PAD)       bf16, zero-padded input features
      a_i       : (n_dst[i], ns_pad[i])    bf16, row-normalized adjacency (mean agg),
                                           columns zero-padded to a 128 multiple
      W_all     : (L, 2, F_PAD, F_PAD)     bf16, [W_self, W_neigh], zero-padded
      bias/gamma/beta_all : (L, 1, F_PAD)  f32, zero-padded epilogue params
      out       : (n_dst[-1], F_PAD)       f32
      h_scratch : (max ns_pad[1:], F_PAD)  bf16, VMEM-resident activations (layers >=1)
    """
    L = len(n_dst)
    h0_ref = refs[0]
    a_refs = refs[1:1 + L]
    w_ref, b_ref, g_ref, bt_ref, out_ref, h_ref = refs[1 + L:]

    # Rows beyond a layer's n_dst are read through zero adjacency columns; zero the
    # scratch once so uninitialized VMEM (possible NaN bit patterns) never leaks in.
    h_ref[...] = jnp.zeros_like(h_ref)

    lane = jax.lax.broadcasted_iota(jnp.int32, (1, F_PAD), 1)

    for i in range(L):
        nd, nsp, fo = n_dst[i], ns_pad[i], f_out_real[i]

        src = h0_ref if i == 0 else h_ref              # layer 0 reads the input directly
        h = src[:nsp, :]                               # (nsp, F_PAD) bf16, 128-aligned slice
        h_dst = src[:nd, :]                            # (nd, F_PAD) bf16
        a = a_refs[i][...]                             # (nd, nsp)   bf16, rows sum to 1

        # Mean aggregation over neighbors: bf16 MXU operands, f32 accumulation.
        neigh = jnp.dot(a, h, preferred_element_type=jnp.float32)        # (nd, F_PAD) f32

        # Two K=128 projections (no concat / no lane-tile relayout copy).
        out = (jnp.dot(h_dst, w_ref[i, 0], preferred_element_type=jnp.float32)
               + jnp.dot(neigh.astype(jnp.bfloat16), w_ref[i, 1],
                         preferred_element_type=jnp.float32)
               + b_ref[i])                                               # (nd, F_PAD) f32
        # Padded lanes of `out` are exactly zero (zero-padded weights/bias).

        if i < L - 1:
            # LayerNorm over the real feature lanes only (eps = 1e-5), then ReLU. f32 VPU.
            mask = lane < fo
            mean = jnp.sum(out, axis=-1, keepdims=True) / fo   # padded lanes are 0
            cent = jnp.where(mask, out - mean, 0.0)
            var = jnp.sum(cent * cent, axis=-1, keepdims=True) / fo
            out = cent * jax.lax.rsqrt(var + _LN_EPS) * g_ref[i] + bt_ref[i]
            out = jnp.maximum(out, 0.0)                        # padded lanes stay 0
            # TODO(synk): F.dropout with drop_rate>0 / training=True not implemented
            # (module default drop_rate=0 => identity).
            h_ref[:nd, :] = out.astype(h_ref.dtype)
        else:
            out_ref[...] = out.astype(out_ref.dtype)


@jax.jit
def sage_model_forward(adjs, h, params):
    """Mirrors SageModel.forward with a single fused pallas_call (jit-compiled)."""
    L = len(params)
    n_src = tuple(a.shape[1] for a in adjs)
    n_dst = tuple(a.shape[0] for a in adjs)
    ns_pad = tuple(_round_up(n, 128) for n in n_src)
    f_out_real = tuple(p[0].shape[1] for p in params)   # W_self stored as (f_in, f_out)
    f_in0 = params[0][0].shape[0]

    # ---- pad everything to a lane-dense layout + bf16 MXU operands (under jit) ----
    h_pad = jnp.zeros((ns_pad[0], F_PAD), jnp.float32).at[:n_src[0], :f_in0].set(h)
    h_pad = h_pad.astype(jnp.bfloat16)

    adjs_pad = []
    for i, a in enumerate(adjs):
        ap = jnp.zeros((n_dst[i], ns_pad[i]), jnp.float32).at[:, :n_src[i]].set(a)
        adjs_pad.append(ap.astype(jnp.bfloat16))        # 1/deg computed in f32, cast once

    w_all, b_all, g_all, bt_all = [], [], [], []
    for (w_self, w_neigh, bias, gamma, beta) in params:
        f_in, f_out = w_self.shape
        w = jnp.zeros((2, F_PAD, F_PAD), jnp.float32)
        w = w.at[0, :f_in, :f_out].set(w_self)           # slab 0: self projection
        w = w.at[1, :f_in, :f_out].set(w_neigh)          # slab 1: neighbor projection
        w_all.append(w.astype(jnp.bfloat16))
        b_all.append(jnp.zeros((1, F_PAD), jnp.float32).at[:, :f_out].set(bias))
        g_all.append(jnp.zeros((1, F_PAD), jnp.float32).at[:, :f_out].set(gamma))
        bt_all.append(jnp.zeros((1, F_PAD), jnp.float32).at[:, :f_out].set(beta))
    w_all = jnp.stack(w_all)    # (L, 2, F_PAD, F_PAD) bf16
    b_all = jnp.stack(b_all)    # (L, 1, F_PAD) f32
    g_all = jnp.stack(g_all)
    bt_all = jnp.stack(bt_all)

    scratch_rows = max(ns_pad[1:]) if L > 1 else 8       # layer-0 acts read from h_pad

    vmem = pl.BlockSpec(memory_space=pltpu.MemorySpace.VMEM)
    kernel = functools.partial(_fused_sage_kernel,
                               n_dst=n_dst, ns_pad=ns_pad, f_out_real=f_out_real)

    out_pad = pl.pallas_call(
        kernel,
        out_shape=jax.ShapeDtypeStruct((n_dst[-1], F_PAD), jnp.float32),
        in_specs=[vmem] * (1 + L + 4),
        out_specs=vmem,
        scratch_shapes=[pltpu.VMEM((scratch_rows, F_PAD), jnp.bfloat16)],
    )(h_pad, *adjs_pad, w_all, b_all, g_all, bt_all)

    return out_pad[:, :f_out_real[-1]]


def _make_adj(key, num_dst, num_src):
    """Dense 0/1 adjacency, row-normalized => mean aggregation.

    DGL SAGEConv('mean') semantics: the dst's own feature enters only via fc_self,
    so no self-loop is injected here; an (unlikely) empty row yields a zero
    neighbor term, matching DGL's behavior for zero in-degree nodes.
    """
    a = (jax.random.uniform(key, (num_dst, num_src)) < 0.5).astype(jnp.float32)
    deg = jnp.maximum(jnp.sum(a, axis=1, keepdims=True), 1.0)
    return a / deg


def _init_params(key, in_feats, h_feats, num_classes, num_layers):
    """Deterministic synthetic parameters matching SageModel.__init__ shapes."""
    dims = [in_feats] + [h_feats] * (num_layers - 1) + [num_classes]
    params = []
    for i in range(num_layers):
        f_in, f_out = dims[i], dims[i + 1]
        key, k1, k2, k3 = jax.random.split(key, 4)
        scale = 1.0 / jnp.sqrt(jnp.float32(f_in))
        # PyTorch Linear stores (out, in); kernel consumes the transpose (in, out).
        w_self = (jax.random.normal(k1, (f_out, f_in), jnp.float32) * scale).T
        w_neigh = (jax.random.normal(k2, (f_out, f_in), jnp.float32) * scale).T
        bias = jax.random.normal(k3, (1, f_out), jnp.float32) * 0.01
        gamma = jnp.ones((1, f_out), jnp.float32)   # LayerNorm weight
        beta = jnp.zeros((1, f_out), jnp.float32)   # LayerNorm bias
        params.append((w_self, w_neigh, bias, gamma, beta))
    return params


if __name__ == "__main__":
    in_feats, h_feats, num_classes, num_layers = 32, 32, 8, 3
    # Node counts per MFG hop (src shrinks toward the seed/dst nodes).
    n_src = [64, 32, 16]
    n_dst = [32, 16, 8]

    root = jax.random.PRNGKey(0)
    k_feat, k_adj, k_par = jax.random.split(root, 3)

    h0 = jax.random.normal(k_feat, (n_src[0], in_feats), jnp.float32)
    adj_keys = jax.random.split(k_adj, num_layers)
    adjs = [_make_adj(adj_keys[i], n_dst[i], n_src[i]) for i in range(num_layers)]
    params = _init_params(k_par, in_feats, h_feats, num_classes, num_layers)

    out = sage_model_forward(adjs, h0, params)
    jax.block_until_ready(out)
    assert out.shape == (n_dst[-1], num_classes)
    assert bool(jnp.all(jnp.isfinite(out)))
    print("KERNEL_OK")
</pallas_src>

<mosaic_0001>
module attributes {stable_mosaic.version = 11 : i64} {
  func.func @_fused_sage_kernel(%arg0: memref<128x128xbf16, #tpu.memory_space<vmem>>, %arg1: memref<32x128xbf16, #tpu.memory_space<vmem>>, %arg2: memref<16x128xbf16, #tpu.memory_space<vmem>>, %arg3: memref<8x128xbf16, #tpu.memory_space<vmem>>, %arg4: memref<3x2x128x128xbf16, #tpu.memory_space<vmem>>, %arg5: memref<3x1x128xf32, #tpu.memory_space<vmem>>, %arg6: memref<3x1x128xf32, #tpu.memory_space<vmem>>, %arg7: memref<3x1x128xf32, #tpu.memory_space<vmem>>, %arg8: memref<8x128xf32, #tpu.memory_space<vmem>>, %arg9: memref<128x128xbf16, #tpu.memory_space<vmem>>) attributes {dimension_semantics = [], scalar_prefetch = 0 : i64, scratch_operands = 1 : i64, tpu.core_type = #tpu.core_type<tc>} {
    %cst = arith.constant 0.000000e+00 : bf16
    %0 = vector.broadcast %cst : bf16 to vector<128x128xbf16>
    %c0 = arith.constant 0 : index
    %c0_0 = arith.constant 0 : index
    %1 = vector.load %arg9[%c0, %c0_0] : memref<128x128xbf16, #tpu.memory_space<vmem>>, vector<128x128xbf16>
    tpu.vector_store %arg9[%c0, %c0_0], %0 {strides = array<i32>} : memref<128x128xbf16, #tpu.memory_space<vmem>>, vector<128x128xbf16>,
    %2 = tpu.iota {dimensions = array<i32: 1>} : vector<1x128xi32>
    %c0_1 = arith.constant 0 : index
    %c0_2 = arith.constant 0 : index
    %3 = vector.load %arg0[%c0_1, %c0_2] : memref<128x128xbf16, #tpu.memory_space<vmem>>, vector<128x128xbf16>
    %c0_3 = arith.constant 0 : index
    %c0_4 = arith.constant 0 : index
    %4 = vector.load %arg0[%c0_3, %c0_4] : memref<128x128xbf16, #tpu.memory_space<vmem>>, vector<32x128xbf16>
    %c0_5 = arith.constant 0 : index
    %c0_6 = arith.constant 0 : index
    %5 = vector.load %arg1[%c0_5, %c0_6] : memref<32x128xbf16, #tpu.memory_space<vmem>>, vector<32x128xbf16>
    %cst_7 = arith.constant dense<0.000000e+00> : vector<32x128xf32>
    %6 = tpu.matmul %5, %3, %cst_7 {dimension_numbers = #tpu.dot_dimension_numbers<[1], [0], [0], [1], [0, 0, 1, 1], [], []>} : vector<32x128xbf16>, vector<128x128xbf16>, vector<32x128xf32> -> vector<32x128xf32>
    %c0_8 = arith.constant 0 : index
    %c0_9 = arith.constant 0 : index
    %c0_10 = arith.constant 0 : index
    %c0_11 = arith.constant 0 : index
    %7 = vector.load %arg4[%c0_8, %c0_9, %c0_10, %c0_11] : memref<3x2x128x128xbf16, #tpu.memory_space<vmem>>, vector<1x1x128x128xbf16>
    %8 = vector.shape_cast %7 : vector<1x1x128x128xbf16> to vector<128x128xbf16>
    %cst_12 = arith.constant dense<0.000000e+00> : vector<32x128xf32>
    %9 = tpu.matmul %4, %8, %cst_12 {dimension_numbers = #tpu.dot_dimension_numbers<[1], [0], [0], [1], [0, 0, 1, 1], [], []>} : vector<32x128xbf16>, vector<128x128xbf16>, vector<32x128xf32> -> vector<32x128xf32>
    %10 = arith.truncf %6 : vector<32x128xf32> to vector<32x128xbf16>
    %c0_13 = arith.constant 0 : index
    %c1 = arith.constant 1 : index
    %c0_14 = arith.constant 0 : index
    %c0_15 = arith.constant 0 : index
    %11 = vector.load %arg4[%c0_13, %c1, %c0_14, %c0_15] : memref<3x2x128x128xbf16, #tpu.memory_space<vmem>>, vector<1x1x128x128xbf16>
    %12 = vector.shape_cast %11 : vector<1x1x128x128xbf16> to vector<128x128xbf16>
    %cst_16 = arith.constant dense<0.000000e+00> : vector<32x128xf32>
    %13 = tpu.matmul %10, %12, %cst_16 {dimension_numbers = #tpu.dot_dimension_numbers<[1], [0], [0], [1], [0, 0, 1, 1], [], []>} : vector<32x128xbf16>, vector<128x128xbf16>, vector<32x128xf32> -> vector<32x128xf32>
    %14 = arith.addf %9, %13 : vector<32x128xf32>
    %c0_17 = arith.constant 0 : index
    %c0_18 = arith.constant 0 : index
    %c0_19 = arith.constant 0 : index
    %15 = vector.load %arg5[%c0_17, %c0_18, %c0_19] : memref<3x1x128xf32, #tpu.memory_space<vmem>>, vector<1x1x128xf32>
    %16 = vector.shape_cast %15 : vector<1x1x128xf32> to vector<1x128xf32>
    %17 = vector.broadcast %16 : vector<1x128xf32> to vector<32x128xf32>
    %18 = arith.addf %14, %17 : vector<32x128xf32>
    %c32_i32 = arith.constant 32 : i32
    %19 = vector.broadcast %c32_i32 : i32 to vector<1x128xi32>
    %20 = arith.cmpi slt, %2, %19 : vector<1x128xi32>
    %cst_20 = arith.constant dense<0.000000e+00> : vector<32xf32>
    %21 = vector.multi_reduction <add>, %18, %cst_20 [1] : vector<32x128xf32> to vector<32xf32>
    %22 = vector.shape_cast %21 : vector<32xf32> to vector<32x1xf32>
    %cst_21 = arith.constant 3.200000e+01 : f32
    %23 = vector.broadcast %cst_21 : f32 to vector<32x1xf32>
    %24 = arith.divf %22, %23 : vector<32x1xf32>
    %25 = vector.broadcast %24 : vector<32x1xf32> to vector<32x128xf32>
    %26 = arith.subf %18, %25 : vector<32x128xf32>
    %cst_22 = arith.constant 0.000000e+00 : f32
    %27 = vector.shape_cast %20 : vector<1x128xi1> to vector<1x128xi1>
    %28 = vector.broadcast %27 : vector<1x128xi1> to vector<32x128xi1>
    %29 = vector.broadcast %cst_22 : f32 to vector<32x128xf32>
    %30 = arith.select %28, %26, %29 : vector<32x128xi1>, vector<32x128xf32>
    %31 = arith.mulf %30, %30 : vector<32x128xf32>
    %cst_23 = arith.constant dense<0.000000e+00> : vector<32xf32>
    %32 = vector.multi_reduction <add>, %31, %cst_23 [1] : vector<32x128xf32> to vector<32xf32>
    %33 = vector.shape_cast %32 : vector<32xf32> to vector<32x1xf32>
    %cst_24 = arith.constant 3.200000e+01 : f32
    %34 = vector.broadcast %cst_24 : f32 to vector<32x1xf32>
    %35 = arith.divf %33, %34 : vector<32x1xf32>
    %cst_25 = arith.constant 9.99999974E-6 : f32
    %36 = vector.broadcast %cst_25 : f32 to vector<32x1xf32>
    %37 = arith.addf %35, %36 : vector<32x1xf32>
    %38 = math.rsqrt %37 : vector<32x1xf32>
    %39 = vector.broadcast %38 : vector<32x1xf32> to vector<32x128xf32>
    %40 = arith.mulf %30, %39 : vector<32x128xf32>
    %c0_26 = arith.constant 0 : index
    %c0_27 = arith.constant 0 : index
    %c0_28 = arith.constant 0 : index
    %41 = vector.load %arg6[%c0_26, %c0_27, %c0_28] : memref<3x1x128xf32, #tpu.memory_space<vmem>>, vector<1x1x128xf32>
    %42 = vector.shape_cast %41 : vector<1x1x128xf32> to vector<1x128xf32>
    %43 = vector.broadcast %42 : vector<1x128xf32> to vector<32x128xf32>
    %44 = arith.mulf %40, %43 : vector<32x128xf32>
    %c0_29 = arith.constant 0 : index
    %c0_30 = arith.constant 0 : index
    %c0_31 = arith.constant 0 : index
    %45 = vector.load %arg7[%c0_29, %c0_30, %c0_31] : memref<3x1x128xf32, #tpu.memory_space<vmem>>, vector<1x1x128xf32>
    %46 = vector.shape_cast %45 : vector<1x1x128xf32> to vector<1x128xf32>
    %47 = vector.broadcast %46 : vector<1x128xf32> to vector<32x128xf32>
    %48 = arith.addf %44, %47 : vector<32x128xf32>
    %cst_32 = arith.constant 0.000000e+00 : f32
    %49 = vector.broadcast %cst_32 : f32 to vector<32x128xf32>
    %50 = arith.maximumf %48, %49 : vector<32x128xf32>
    %51 = arith.truncf %50 : vector<32x128xf32> to vector<32x128xbf16>
    %c0_33 = arith.constant 0 : index
    %c0_34 = arith.constant 0 : index
    %52 = vector.load %arg9[%c0_33, %c0_34] : memref<128x128xbf16, #tpu.memory_space<vmem>>, vector<32x128xbf16>
    tpu.vector_store %arg9[%c0_33, %c0_34], %51 {strides = array<i32>} : memref<128x128xbf16, #tpu.memory_space<vmem>>, vector<32x128xbf16>,
    %c0_35 = arith.constant 0 : index
    %c0_36 = arith.constant 0 : index
    %53 = vector.load %arg9[%c0_35, %c0_36] : memref<128x128xbf16, #tpu.memory_space<vmem>>, vector<128x128xbf16>
    %c0_37 = arith.constant 0 : index
    %c0_38 = arith.constant 0 : index
    %54 = vector.load %arg9[%c0_37, %c0_38] : memref<128x128xbf16, #tpu.memory_space<vmem>>, vector<16x128xbf16>
    %c0_39 = arith.constant 0 : index
    %c0_40 = arith.constant 0 : index
    %55 = vector.load %arg2[%c0_39, %c0_40] : memref<16x128xbf16, #tpu.memory_space<vmem>>, vector<16x128xbf16>
    %cst_41 = arith.constant dense<0.000000e+00> : vector<16x128xf32>
    %56 = tpu.matmul %55, %53, %cst_41 {dimension_numbers = #tpu.dot_dimension_numbers<[1], [0], [0], [1], [0, 0, 1, 1], [], []>} : vector<16x128xbf16>, vector<128x128xbf16>, vector<16x128xf32> -> vector<16x128xf32>
    %c1_42 = arith.constant 1 : index
    %c0_43 = arith.constant 0 : index
    %c0_44 = arith.constant 0 : index
    %c0_45 = arith.constant 0 : index
    %57 = vector.load %arg4[%c1_42, %c0_43, %c0_44, %c0_45] : memref<3x2x128x128xbf16, #tpu.memory_space<vmem>>, vector<1x1x128x128xbf16>
    %58 = vector.shape_cast %57 : vector<1x1x128x128xbf16> to vector<128x128xbf16>
    %cst_46 = arith.constant dense<0.000000e+00> : vector<16x128xf32>
    %59 = tpu.matmul %54, %58, %cst_46 {dimension_numbers = #tpu.dot_dimension_numbers<[1], [0], [0], [1], [0, 0, 1, 1], [], []>} : vector<16x128xbf16>, vector<128x128xbf16>, vector<16x128xf32> -> vector<16x128xf32>
    %60 = arith.truncf %56 : vector<16x128xf32> to vector<16x128xbf16>
    %c1_47 = arith.constant 1 : index
    %c1_48 = arith.constant 1 : index
    %c0_49 = arith.constant 0 : index
    %c0_50 = arith.constant 0 : index
    %61 = vector.load %arg4[%c1_47, %c1_48, %c0_49, %c0_50] : memref<3x2x128x128xbf16, #tpu.memory_space<vmem>>, vector<1x1x128x128xbf16>
    %62 = vector.shape_cast %61 : vector<1x1x128x128xbf16> to vector<128x128xbf16>
    %cst_51 = arith.constant dense<0.000000e+00> : vector<16x128xf32>
    %63 = tpu.matmul %60, %62, %cst_51 {dimension_numbers = #tpu.dot_dimension_numbers<[1], [0], [0], [1], [0, 0, 1, 1], [], []>} : vector<16x128xbf16>, vector<128x128xbf16>, vector<16x128xf32> -> vector<16x128xf32>
    %64 = arith.addf %59, %63 : vector<16x128xf32>
    %c1_52 = arith.constant 1 : index
    %c0_53 = arith.constant 0 : index
    %c0_54 = arith.constant 0 : index
    %65 = vector.load %arg5[%c1_52, %c0_53, %c0_54] : memref<3x1x128xf32, #tpu.memory_space<vmem>>, vector<1x1x128xf32>
    %66 = vector.shape_cast %65 : vector<1x1x128xf32> to vector<1x128xf32>
    %67 = vector.broadcast %66 : vector<1x128xf32> to vector<16x128xf32>
    %68 = arith.addf %64, %67 : vector<16x128xf32>
    %c32_i32_55 = arith.constant 32 : i32
    %69 = vector.broadcast %c32_i32_55 : i32 to vector<1x128xi32>
    %70 = arith.cmpi slt, %2, %69 : vector<1x128xi32>
    %cst_56 = arith.constant dense<0.000000e+00> : vector<16xf32>
    %71 = vector.multi_reduction <add>, %68, %cst_56 [1] : vector<16x128xf32> to vector<16xf32>
    %72 = vector.shape_cast %71 : vector<16xf32> to vector<16x1xf32>
    %cst_57 = arith.constant 3.200000e+01 : f32
    %73 = vector.broadcast %cst_57 : f32 to vector<16x1xf32>
    %74 = arith.divf %72, %73 : vector<16x1xf32>
    %75 = vector.broadcast %74 : vector<16x1xf32> to vector<16x128xf32>
    %76 = arith.subf %68, %75 : vector<16x128xf32>
    %cst_58 = arith.constant 0.000000e+00 : f32
    %77 = vector.shape_cast %70 : vector<1x128xi1> to vector<1x128xi1>
    %78 = vector.broadcast %77 : vector<1x128xi1> to vector<16x128xi1>
    %79 = vector.broadcast %cst_58 : f32 to vector<16x128xf32>
    %80 = arith.select %78, %76, %79 : vector<16x128xi1>, vector<16x128xf32>
    %81 = arith.mulf %80, %80 : vector<16x128xf32>
    %cst_59 = arith.constant dense<0.000000e+00> : vector<16xf32>
    %82 = vector.multi_reduction <add>, %81, %cst_59 [1] : vector<16x128xf32> to vector<16xf32>
    %83 = vector.shape_cast %82 : vector<16xf32> to vector<16x1xf32>
    %cst_60 = arith.constant 3.200000e+01 : f32
    %84 = vector.broadcast %cst_60 : f32 to vector<16x1xf32>
    %85 = arith.divf %83, %84 : vector<16x1xf32>
    %cst_61 = arith.constant 9.99999974E-6 : f32
    %86 = vector.broadcast %cst_61 : f32 to vector<16x1xf32>
    %87 = arith.addf %85, %86 : vector<16x1xf32>
    %88 = math.rsqrt %87 : vector<16x1xf32>
    %89 = vector.broadcast %88 : vector<16x1xf32> to vector<16x128xf32>
    %90 = arith.mulf %80, %89 : vector<16x128xf32>
    %c1_62 = arith.constant 1 : index
    %c0_63 = arith.constant 0 : index
    %c0_64 = arith.constant 0 : index
    %91 = vector.load %arg6[%c1_62, %c0_63, %c0_64] : memref<3x1x128xf32, #tpu.memory_space<vmem>>, vector<1x1x128xf32>
    %92 = vector.shape_cast %91 : vector<1x1x128xf32> to vector<1x128xf32>
    %93 = vector.broadcast %92 : vector<1x128xf32> to vector<16x128xf32>
    %94 = arith.mulf %90, %93 : vector<16x128xf32>
    %c1_65 = arith.constant 1 : index
    %c0_66 = arith.constant 0 : index
    %c0_67 = arith.constant 0 : index
    %95 = vector.load %arg7[%c1_65, %c0_66, %c0_67] : memref<3x1x128xf32, #tpu.memory_space<vmem>>, vector<1x1x128xf32>
    %96 = vector.shape_cast %95 : vector<1x1x128xf32> to vector<1x128xf32>
    %97 = vector.broadcast %96 : vector<1x128xf32> to vector<16x128xf32>
    %98 = arith.addf %94, %97 : vector<16x128xf32>
    %cst_68 = arith.constant 0.000000e+00 : f32
    %99 = vector.broadcast %cst_68 : f32 to vector<16x128xf32>
    %100 = arith.maximumf %98, %99 : vector<16x128xf32>
    %101 = arith.truncf %100 : vector<16x128xf32> to vector<16x128xbf16>
    %c0_69 = arith.constant 0 : index
    %c0_70 = arith.constant 0 : index
    %102 = vector.load %arg9[%c0_69, %c0_70] : memref<128x128xbf16, #tpu.memory_space<vmem>>, vector<16x128xbf16>
    tpu.vector_store %arg9[%c0_69, %c0_70], %101 {strides = array<i32>} : memref<128x128xbf16, #tpu.memory_space<vmem>>, vector<16x128xbf16>,
    %c0_71 = arith.constant 0 : index
    %c0_72 = arith.constant 0 : index
    %103 = vector.load %arg9[%c0_71, %c0_72] : memref<128x128xbf16, #tpu.memory_space<vmem>>, vector<128x128xbf16>
    %c0_73 = arith.constant 0 : index
    %c0_74 = arith.constant 0 : index
    %104 = vector.load %arg9[%c0_73, %c0_74] : memref<128x128xbf16, #tpu.memory_space<vmem>>, vector<8x128xbf16>
    %c0_75 = arith.constant 0 : index
    %c0_76 = arith.constant 0 : index
    %105 = vector.load %arg3[%c0_75, %c0_76] : memref<8x128xbf16, #tpu.memory_space<vmem>>, vector<8x128xbf16>
    %cst_77 = arith.constant dense<0.000000e+00> : vector<8x128xf32>
    %106 = tpu.matmul %105, %103, %cst_77 {dimension_numbers = #tpu.dot_dimension_numbers<[1], [0], [0], [1], [0, 0, 1, 1], [], []>} : vector<8x128xbf16>, vector<128x128xbf16>, vector<8x128xf32> -> vector<8x128xf32>
    %c2 = arith.constant 2 : index
    %c0_78 = arith.constant 0 : index
    %c0_79 = arith.constant 0 : index
    %c0_80 = arith.constant 0 : index
    %107 = vector.load %arg4[%c2, %c0_78, %c0_79, %c0_80] : memref<3x2x128x128xbf16, #tpu.memory_space<vmem>>, vector<1x1x128x128xbf16>
    %108 = vector.shape_cast %107 : vector<1x1x128x128xbf16> to vector<128x128xbf16>
    %cst_81 = arith.constant dense<0.000000e+00> : vector<8x128xf32>
    %109 = tpu.matmul %104, %108, %cst_81 {dimension_numbers = #tpu.dot_dimension_numbers<[1], [0], [0], [1], [0, 0, 1, 1], [], []>} : vector<8x128xbf16>, vector<128x128xbf16>, vector<8x128xf32> -> vector<8x128xf32>
    %110 = arith.truncf %106 : vector<8x128xf32> to vector<8x128xbf16>
    %c2_82 = arith.constant 2 : index
    %c1_83 = arith.constant 1 : index
    %c0_84 = arith.constant 0 : index
    %c0_85 = arith.constant 0 : index
    %111 = vector.load %arg4[%c2_82, %c1_83, %c0_84, %c0_85] : memref<3x2x128x128xbf16, #tpu.memory_space<vmem>>, vector<1x1x128x128xbf16>
    %112 = vector.shape_cast %111 : vector<1x1x128x128xbf16> to vector<128x128xbf16>
    %cst_86 = arith.constant dense<0.000000e+00> : vector<8x128xf32>
    %113 = tpu.matmul %110, %112, %cst_86 {dimension_numbers = #tpu.dot_dimension_numbers<[1], [0], [0], [1], [0, 0, 1, 1], [], []>} : vector<8x128xbf16>, vector<128x128xbf16>, vector<8x128xf32> -> vector<8x128xf32>
    %114 = arith.addf %109, %113 : vector<8x128xf32>
    %c2_87 = arith.constant 2 : index
    %c0_88 = arith.constant 0 : index
    %c0_89 = arith.constant 0 : index
    %115 = vector.load %arg5[%c2_87, %c0_88, %c0_89] : memref<3x1x128xf32, #tpu.memory_space<vmem>>, vector<1x1x128xf32>
    %116 = vector.shape_cast %115 : vector<1x1x128xf32> to vector<1x128xf32>
    %117 = vector.broadcast %116 : vector<1x128xf32> to vector<8x128xf32>
    %118 = arith.addf %114, %117 : vector<8x128xf32>
    %c0_90 = arith.constant 0 : index
    %c0_91 = arith.constant 0 : index
    %119 = vector.load %arg8[%c0_90, %c0_91] : memref<8x128xf32, #tpu.memory_space<vmem>>, vector<8x128xf32>
    tpu.vector_store %arg8[%c0_90, %c0_91], %118 {strides = array<i32>} : memref<8x128xf32, #tpu.memory_space<vmem>>, vector<8x128xf32>,
    return
  }
}

</mosaic_0001>

<llo_original>
// kernel: sage_model_forward.1
$region0: #{sage_model_forward.1}
  #allocation0 [shape = 'u32[]', space=smem, size = 0x4, offset = 0x4, fixed_abs, tag = 'smem constant byte address 0x4 - core index']
  #allocation1 [shape = 'u32[144,128]{1,0:T(1,128)}', space=vmem, size = 0x12000, scoped, tag = 'internal scratch']
  #allocation2 [shape = 'bf16[128,128]{1,0:T(16,128)(2,1)}', space=vmem, size = 0x8000, scoped, tag = 'scratch operand']
  %s0 = inlined_call_operand.vmem [shape: bf16[128,128], index: 0, kind: input, shape index: {}]
  %s1 = inlined_call_operand.vmem [shape: bf16[32,128], index: 1, kind: input, shape index: {}]
  %s2 = inlined_call_operand.vmem [shape: bf16[16,128], index: 2, kind: input, shape index: {}]
  %s3 = inlined_call_operand.vmem [shape: bf16[8,128], index: 3, kind: input, shape index: {}]
  %s4 = inlined_call_operand.vmem [shape: bf16[3,2,128,128], index: 4, kind: input, shape index: {}]
  %s5 = inlined_call_operand.vmem [shape: f32[3,1,128], index: 5, kind: input, shape index: {}]
  %s6 = inlined_call_operand.vmem [shape: f32[3,1,128], index: 6, kind: input, shape index: {}]
  %s7 = inlined_call_operand.vmem [shape: f32[3,1,128], index: 7, kind: input, shape index: {}]
  %s8 = inlined_call_operand.hbm [shape: f32[8,128], index: 8, kind: output, shape index: {}]
  %s9 = sld [smem:[#allocation0]]
  $region42: #{sage_model_forward.1} parent=0
    _
  %s11 = ssub.s32 1, %s9
  %s12 = scalar_select 0, %s11, %s9
  $region1: #{sage_model_forward.1} parent=0
    #allocation3 [shape = 'u8[4096]{0}', space=vmem, size = 0x1000, scoped, tag = 'output window, operand 0, single buffered']
    #allocation4 [shape = 's32[1]{0}', space=sflag, size = 0x4, scoped, tag = 'scoped memory for sage_model_forward.1']
    %13 = vsyncpa [#allocation4], 0
    // Predicated region
    $region2: #{sage_model_forward.1} parent=1 // pred_check
      _
    $region3: #{sage_model_forward.1} parent=1 // pred_check_branch
      %15 = sbr.rel (0) target = $region5
    $region4: #{sage_model_forward.1} parent=1 // pred_region
      _
    $region5: #{sage_model_forward.1} parent=1 // pred_fallthru
      _
    // Predicated region
    $region6: #{sage_model_forward.1} parent=1 // pred_check
      _
    $region7: #{sage_model_forward.1} parent=1 // pred_check_branch
      %17 = sbr.rel (0) target = $region9
    $region8: #{sage_model_forward.1} parent=1 // pred_region
      _
    $region9: #{sage_model_forward.1} parent=1 // pred_fallthru
      _
    // Predicated region
    $region10: #{sage_model_forward.1} parent=1 // pred_check
      _
    $region11: #{sage_model_forward.1} parent=1 // pred_check_branch
      %19 = sbr.rel (0) target = $region13
    $region12: #{sage_model_forward.1} parent=1 // pred_region
      _
    $region13: #{sage_model_forward.1} parent=1 // pred_fallthru
      _
    // Predicated region
    $region14: #{sage_model_forward.1} parent=1 // pred_check
      _
    $region15: #{sage_model_forward.1} parent=1 // pred_check_branch
      %21 = sbr.rel (0) target = $region17
    $region16: #{sage_model_forward.1} parent=1 // pred_region
      _
    $region17: #{sage_model_forward.1} parent=1 // pred_fallthru
      _
    // Predicated region
    $region18: #{sage_model_forward.1} parent=1 // pred_check
      _
    $region19: #{sage_model_forward.1} parent=1 // pred_check_branch
      %23 = sbr.rel (0) target = $region21
    $region20: #{sage_model_forward.1} parent=1 // pred_region
      _
    $region21: #{sage_model_forward.1} parent=1 // pred_fallthru
      _
    // Predicated region
    $region22: #{sage_model_forward.1} parent=1 // pred_check
      _
    $region23: #{sage_model_forward.1} parent=1 // pred_check_branch
      %25 = sbr.rel (0) target = $region25
    $region24: #{sage_model_forward.1} parent=1 // pred_region
      _
    $region25: #{sage_model_forward.1} parent=1 // pred_fallthru
      _
    // Predicated region
    $region26: #{sage_model_forward.1} parent=1 // pred_check
      _
    $region27: #{sage_model_forward.1} parent=1 // pred_check_branch
      %27 = sbr.rel (0) target = $region29
    $region28: #{sage_model_forward.1} parent=1 // pred_region
      _
    $region29: #{sage_model_forward.1} parent=1 // pred_fallthru
      _
    // Predicated region
    $region30: #{sage_model_forward.1} parent=1 // pred_check
      _
    $region31: #{sage_model_forward.1} parent=1 // pred_check_branch
      %29 = sbr.rel (0) target = $region33
    $region32: #{sage_model_forward.1} parent=1 // pred_region
      _
    $region33: #{sage_model_forward.1} parent=1 // pred_fallthru
      _
    %31 = vst [vmem:[#allocation2] sm:$0xff] 0
    %32 = vst [vmem:[#allocation2 + $0x8] sm:$0xff] 0
    %33 = vst [vmem:[#allocation2 + $0x10] sm:$0xff] 0
    %34 = vst [vmem:[#allocation2 + $0x18] sm:$0xff] 0
    %35 = vst [vmem:[#allocation2 + $0x20] sm:$0xff] 0
    %36 = vst [vmem:[#allocation2 + $0x28] sm:$0xff] 0
    %37 = vst [vmem:[#allocation2 + $0x30] sm:$0xff] 0
    %38 = vst [vmem:[#allocation2 + $0x38] sm:$0xff] 0
    %v39 = vlaneseq
    %v40 = vand.u32 %v39, 127
    %v41 = vld [vmem:[%s0] sm:$0xf]
    %v42 = vld [vmem:[%s0 + $0x4] sm:$0xf]
    %v43 = vld [vmem:[%s0 + $0x8] sm:$0xf]
    %v44 = vld [vmem:[%s0 + $0xc] sm:$0xf]
    %v45 = vld [vmem:[%s0 + $0x10] sm:$0xf]
    %v46 = vld [vmem:[%s0 + $0x14] sm:$0xf]
    %v47 = vld [vmem:[%s0 + $0x18] sm:$0xf]
    %v48 = vld [vmem:[%s0 + $0x1c] sm:$0xf]
    %v49 = vld [vmem:[%s0 + $0x20] sm:$0xf]
    %v50 = vld [vmem:[%s0 + $0x24] sm:$0xf]
    %v51 = vld [vmem:[%s0 + $0x28] sm:$0xf]
    %v52 = vld [vmem:[%s0 + $0x2c] sm:$0xf]
    %v53 = vld [vmem:[%s0 + $0x30] sm:$0xf]
    %v54 = vld [vmem:[%s0 + $0x34] sm:$0xf]
    %v55 = vld [vmem:[%s0 + $0x38] sm:$0xf]
    %v56 = vld [vmem:[%s0 + $0x3c] sm:$0xf]
    %v57 = vld [vmem:[%s0] sm:$0xf]
    %v58 = vld [vmem:[%s0 + $0x4] sm:$0xf]
    %v59 = vld [vmem:[%s0 + $0x8] sm:$0xf]
    %v60 = vld [vmem:[%s0 + $0xc] sm:$0xf]
    %v61 = vld [vmem:[%s1] sm:$0xf]
    %v62 = vld [vmem:[%s1 + $0x4] sm:$0xf]
    %v63 = vld [vmem:[%s1 + $0x8] sm:$0xf]
    %v64 = vld [vmem:[%s1 + $0xc] sm:$0xf]
    %v69 = vunpack.c.l.b16 %v61
    %v70 = vunpack.c.l.b16 %v62
    %v71 = vunpack.c.l.b16 %v63
    %v72 = vunpack.c.l.b16 %v64
    %v73 = vpack.c.b16 %v70, %v69
    %v74 = vpack.c.b16 %v72, %v71
    %v93 = vunpack.c.l.b16 %v41
    %v94 = vunpack.c.l.b16 %v42
    %v95 = vunpack.c.l.b16 %v43
    %v96 = vunpack.c.l.b16 %v44
    %v97 = vunpack.c.l.b16 %v45
    %v98 = vunpack.c.l.b16 %v46
    %v99 = vunpack.c.l.b16 %v47
    %v100 = vunpack.c.l.b16 %v48
    %v101 = vunpack.c.l.b16 %v49
    %v102 = vunpack.c.l.b16 %v50
    %v103 = vunpack.c.l.b16 %v51
    %v104 = vunpack.c.l.b16 %v52
    %v105 = vunpack.c.l.b16 %v53
    %v106 = vunpack.c.l.b16 %v54
    %v107 = vunpack.c.l.b16 %v55
    %v108 = vunpack.c.l.b16 %v56
    %v109 = vpack.c.b16 %v94, %v93
    %v110 = vpack.c.b16 %v96, %v95
    %v111 = vpack.c.b16 %v98, %v97
    %v112 = vpack.c.b16 %v100, %v99
    %v113 = vpack.c.b16 %v102, %v101
    %v114 = vpack.c.b16 %v104, %v103
    %v115 = vpack.c.b16 %v106, %v105
    %v116 = vpack.c.b16 %v108, %v107
    %125 = vmatprep.subr.bf16.mxu0 0
    %126 = vmatpush1.bf16.msra.mxu0 %v109
    %127 = vmatprep.subr.bf16.mxu0 0
    %128 = vmatpush1.bf16.msra.mxu0 %v110
    %129 = vmatprep.subr.bf16.mxu0 0
    %130 = vmatpush1.bf16.msra.mxu0 %v111
    %131 = vmatprep.subr.bf16.mxu0 0
    %132 = vmatpush1.bf16.msra.mxu0 %v112
    %133 = vmatprep.subr.bf16.mxu0 0
    %134 = vmatpush1.bf16.msra.mxu0 %v113
    %135 = vmatprep.subr.bf16.mxu0 0
    %136 = vmatpush1.bf16.msra.mxu0 %v114
    %137 = vmatprep.subr.bf16.mxu0 0
    %138 = vmatpush1.bf16.msra.mxu0 %v115
    %139 = vmatprep.subr.bf16.mxu0 0
    %140 = vmatpush1.bf16.msra.mxu0 %v116
    %141 = vmatprep.subr.bf16.mxu0 0
    %142 = vmatpush1.bf16.msra.mxu0 0
    %143 = vmatprep.subr.bf16.mxu0 0
    %144 = vmatpush1.bf16.msra.mxu0 0
    %145 = vmatprep.subr.bf16.mxu0 0
    %146 = vmatpush1.bf16.msra.mxu0 0
    %147 = vmatprep.subr.bf16.mxu0 0
    %148 = vmatpush1.bf16.msra.mxu0 0
    %149 = vmatprep.subr.bf16.mxu0 0
    %150 = vmatpush1.bf16.msra.mxu0 0
    %151 = vmatprep.subr.bf16.mxu0 0
    %152 = vmatpush1.bf16.msra.mxu0 0
    %153 = vmatprep.subr.bf16.mxu0 0
    %154 = vmatpush1.bf16.msra.mxu0 0
    %155 = vmatprep.subr.bf16.mxu0 0
    %156 = vmatpush1.bf16.msra.mxu0 0
    %157 = vmatprep.mubr.bf16.mxu0 0
    %158 = vmatmul.mubr.bf16.gmra.mrb[0].mxu0 %v73
    %v159 = vpop.f32.mrb[0].mxu0
    %v160 = vadd.f32 0.0, %v159
    %v161 = vpop.f32.mrb[0].mxu0
    %v162 = vpop.f32.mrb[0].mxu0
    %v163 = vadd.f32 0.0, %v162
    %v164 = vpop.f32.mrb[0].mxu0
    %165 = vmatprep.mubr.bf16.mxu0 0
    %166 = vmatmul.mubr.bf16.gmra.mrb[0].mxu0 %v74
    %v167 = vpop.f32.mrb[0].mxu0
    %v168 = vadd.f32 0.0, %v167
    %v169 = vpop.f32.mrb[0].mxu0
    %v170 = vpop.f32.mrb[0].mxu0
    %v171 = vadd.f32 0.0, %v170
    %v172 = vpop.f32.mrb[0].mxu0
    %173 = vdwg.mxu0
    %v174 = vld [vmem:[%s4] sm:$0xf]
    %v175 = vld [vmem:[%s4 + $0x4] sm:$0xf]
    %v176 = vld [vmem:[%s4 + $0x8] sm:$0xf]
    %v177 = vld [vmem:[%s4 + $0xc] sm:$0xf]
    %v178 = vld [vmem:[%s4 + $0x10] sm:$0xf]
    %v179 = vld [vmem:[%s4 + $0x14] sm:$0xf]
    %v180 = vld [vmem:[%s4 + $0x18] sm:$0xf]
    %v181 = vld [vmem:[%s4 + $0x1c] sm:$0xf]
    %v182 = vld [vmem:[%s4 + $0x20] sm:$0xf]
    %v183 = vld [vmem:[%s4 + $0x24] sm:$0xf]
    %v184 = vld [vmem:[%s4 + $0x28] sm:$0xf]
    %v185 = vld [vmem:[%s4 + $0x2c] sm:$0xf]
    %v186 = vld [vmem:[%s4 + $0x30] sm:$0xf]
    %v187 = vld [vmem:[%s4 + $0x34] sm:$0xf]
    %v188 = vld [vmem:[%s4 + $0x38] sm:$0xf]
    %v189 = vld [vmem:[%s4 + $0x3c] sm:$0xf]
    %v190 = vpack.c.bf16 %v163, %v160
    %v191 = vpack.c.bf16 %v171, %v168
    %s192 = scalar_lea.vmem %s4, 64
    %v193 = vld [vmem:[%s192] sm:$0xf]
    %v194 = vld [vmem:[%s192 + $0x4] sm:$0xf]
    %v195 = vld [vmem:[%s192 + $0x8] sm:$0xf]
    %v196 = vld [vmem:[%s192 + $0xc] sm:$0xf]
    %v197 = vld [vmem:[%s192 + $0x10] sm:$0xf]
    %v198 = vld [vmem:[%s192 + $0x14] sm:$0xf]
    %v199 = vld [vmem:[%s192 + $0x18] sm:$0xf]
    %v200 = vld [vmem:[%s192 + $0x1c] sm:$0xf]
    %v201 = vld [vmem:[%s192 + $0x20] sm:$0xf]
    %v202 = vld [vmem:[%s192 + $0x24] sm:$0xf]
    %v203 = vld [vmem:[%s192 + $0x28] sm:$0xf]
    %v204 = vld [vmem:[%s192 + $0x2c] sm:$0xf]
    %v205 = vld [vmem:[%s192 + $0x30] sm:$0xf]
    %v206 = vld [vmem:[%s192 + $0x34] sm:$0xf]
    %v207 = vld [vmem:[%s192 + $0x38] sm:$0xf]
    %v208 = vld [vmem:[%s192 + $0x3c] sm:$0xf]
    %v225 = vunpack.c.l.b16 %v193
    %v226 = vunpack.c.l.b16 %v194
    %v227 = vunpack.c.l.b16 %v195
    %v228 = vunpack.c.l.b16 %v196
    %v229 = vunpack.c.l.b16 %v197
    %v230 = vunpack.c.l.b16 %v198
    %v231 = vunpack.c.l.b16 %v199
    %v232 = vunpack.c.l.b16 %v200
    %v233 = vunpack.c.l.b16 %v201
    %v234 = vunpack.c.l.b16 %v202
    %v235 = vunpack.c.l.b16 %v203
    %v236 = vunpack.c.l.b16 %v204
    %v237 = vunpack.c.l.b16 %v205
    %v238 = vunpack.c.l.b16 %v206
    %v239 = vunpack.c.l.b16 %v207
    %v240 = vunpack.c.l.b16 %v208
    %v241 = vpack.c.b16 %v226, %v225
    %v242 = vpack.c.b16 %v228, %v227
    %v243 = vpack.c.b16 %v230, %v229
    %v244 = vpack.c.b16 %v232, %v231
    %v245 = vpack.c.b16 %v234, %v233
    %v246 = vpack.c.b16 %v236, %v235
    %v247 = vpack.c.b16 %v238, %v237
    %v248 = vpack.c.b16 %v240, %v239
    %257 = vmatprep.subr.bf16.mxu0 0
    %258 = vmatpush1.bf16.msra.mxu0 %v241
    %259 = vmatprep.subr.bf16.mxu0 0
    %260 = vmatpush1.bf16.msra.mxu0 %v242
    %261 = vmatprep.subr.bf16.mxu0 0
    %262 = vmatpush1.bf16.msra.mxu0 %v243
    %263 = vmatprep.subr.bf16.mxu0 0
    %264 = vmatpush1.bf16.msra.mxu0 %v244
    %265 = vmatprep.subr.bf16.mxu0 0
    %266 = vmatpush1.bf16.msra.mxu0 %v245
    %267 = vmatprep.subr.bf16.mxu0 0
    %268 = vmatpush1.bf16.msra.mxu0 %v246
    %269 = vmatprep.subr.bf16.mxu0 0
    %270 = vmatpush1.bf16.msra.mxu0 %v247
    %271 = vmatprep.subr.bf16.mxu0 0
    %272 = vmatpush1.bf16.msra.mxu0 %v248
    %273 = vmatprep.subr.bf16.mxu0 0
    %274 = vmatpush1.bf16.msra.mxu0 0
    %275 = vmatprep.subr.bf16.mxu0 0
    %276 = vmatpush1.bf16.msra.mxu0 0
    %277 = vmatprep.subr.bf16.mxu0 0
    %278 = vmatpush1.bf16.msra.mxu0 0
    %279 = vmatprep.subr.bf16.mxu0 0
    %280 = vmatpush1.bf16.msra.mxu0 0
    %281 = vmatprep.subr.bf16.mxu0 0
    %282 = vmatpush1.bf16.msra.mxu0 0
    %283 = vmatprep.subr.bf16.mxu0 0
    %284 = vmatpush1.bf16.msra.mxu0 0
    %285 = vmatprep.subr.bf16.mxu0 0
    %286 = vmatpush1.bf16.msra.mxu0 0
    %287 = vmatprep.subr.bf16.mxu0 0
    %288 = vmatpush1.bf16.msra.mxu0 0
    %289 = vmatprep.mubr.bf16.mxu0 0
    %290 = vmatmul.mubr.bf16.gmra.mrb[0].mxu0 %v190
    %v291 = vpop.f32.mrb[0].mxu0
    %v292 = vadd.f32 0.0, %v291
    %v293 = vpop.f32.mrb[0].mxu0
    %v294 = vpop.f32.mrb[0].mxu0
    %v295 = vadd.f32 0.0, %v294
    %v296 = vpop.f32.mrb[0].mxu0
    %297 = vmatprep.mubr.bf16.mxu0 0
    %298 = vmatmul.mubr.bf16.gmra.mrb[0].mxu0 %v191
    %v299 = vpop.f32.mrb[0].mxu0
    %v300 = vadd.f32 0.0, %v299
    %v301 = vpop.f32.mrb[0].mxu0
    %v302 = vpop.f32.mrb[0].mxu0
    %v303 = vadd.f32 0.0, %v302
    %v304 = vpop.f32.mrb[0].mxu0
    %305 = vdwg.mxu0
    %v310 = vunpack.c.l.b16 %v57
    %v311 = vunpack.c.l.b16 %v58
    %v312 = vunpack.c.l.b16 %v59
    %v313 = vunpack.c.l.b16 %v60
    %v314 = vpack.c.b16 %v311, %v310
    %v315 = vpack.c.b16 %v313, %v312
    %v334 = vunpack.c.l.b16 %v174
    %v335 = vunpack.c.l.b16 %v175
    %v336 = vunpack.c.l.b16 %v176
    %v337 = vunpack.c.l.b16 %v177
    %v338 = vunpack.c.l.b16 %v178
    %v339 = vunpack.c.l.b16 %v179
    %v340 = vunpack.c.l.b16 %v180
    %v341 = vunpack.c.l.b16 %v181
    %v342 = vunpack.c.l.b16 %v182
    %v343 = vunpack.c.l.b16 %v183
    %v344 = vunpack.c.l.b16 %v184
    %v345 = vunpack.c.l.b16 %v185
    %v346 = vunpack.c.l.b16 %v186
    %v347 = vunpack.c.l.b16 %v187
    %v348 = vunpack.c.l.b16 %v188
    %v349 = vunpack.c.l.b16 %v189
    %v350 = vpack.c.b16 %v335, %v334
    %v351 = vpack.c.b16 %v337, %v336
    %v352 = vpack.c.b16 %v339, %v338
    %v353 = vpack.c.b16 %v341, %v340
    %v354 = vpack.c.b16 %v343, %v342
    %v355 = vpack.c.b16 %v345, %v344
    %v356 = vpack.c.b16 %v347, %v346
    %v357 = vpack.c.b16 %v349, %v348
    %366 = vmatprep.subr.bf16.mxu0 0
    %367 = vmatpush1.bf16.msra.mxu0 %v350
    %368 = vmatprep.subr.bf16.mxu0 0
    %369 = vmatpush1.bf16.msra.mxu0 %v351
    %370 = vmatprep.subr.bf16.mxu0 0
    %371 = vmatpush1.bf16.msra.mxu0 %v352
    %372 = vmatprep.subr.bf16.mxu0 0
    %373 = vmatpush1.bf16.msra.mxu0 %v353
    %374 = vmatprep.subr.bf16.mxu0 0
    %375 = vmatpush1.bf16.msra.mxu0 %v354
    %376 = vmatprep.subr.bf16.mxu0 0
    %377 = vmatpush1.bf16.msra.mxu0 %v355
    %378 = vmatprep.subr.bf16.mxu0 0
    %379 = vmatpush1.bf16.msra.mxu0 %v356
    %380 = vmatprep.subr.bf16.mxu0 0
    %381 = vmatpush1.bf16.msra.mxu0 %v357
    %382 = vmatprep.subr.bf16.mxu0 0
    %383 = vmatpush1.bf16.msra.mxu0 0
    %384 = vmatprep.subr.bf16.mxu0 0
    %385 = vmatpush1.bf16.msra.mxu0 0
    %386 = vmatprep.subr.bf16.mxu0 0
    %387 = vmatpush1.bf16.msra.mxu0 0
    %388 = vmatprep.subr.bf16.mxu0 0
    %389 = vmatpush1.bf16.msra.mxu0 0
    %390 = vmatprep.subr.bf16.mxu0 0
    %391 = vmatpush1.bf16.msra.mxu0 0
    %392 = vmatprep.subr.bf16.mxu0 0
    %393 = vmatpush1.bf16.msra.mxu0 0
    %394 = vmatprep.subr.bf16.mxu0 0
    %395 = vmatpush1.bf16.msra.mxu0 0
    %396 = vmatprep.subr.bf16.mxu0 0
    %397 = vmatpush1.bf16.msra.mxu0 0
    %398 = vmatprep.mubr.bf16.mxu0 0
    %399 = vmatmul.mubr.bf16.gmra.mrb[0].mxu0 %v314
    %v400 = vpop.f32.mrb[0].mxu0
    %v401 = vadd.f32 %v292, %v400
    %v402 = vpop.f32.mrb[0].mxu0
    %v403 = vpop.f32.mrb[0].mxu0
    %v404 = vadd.f32 %v295, %v403
    %v405 = vpop.f32.mrb[0].mxu0
    %406 = vmatprep.mubr.bf16.mxu0 0
    %407 = vmatmul.mubr.bf16.gmra.mrb[0].mxu0 %v315
    %v408 = vpop.f32.mrb[0].mxu0
    %v409 = vadd.f32 %v300, %v408
    %v410 = vpop.f32.mrb[0].mxu0
    %v411 = vpop.f32.mrb[0].mxu0
    %v412 = vadd.f32 %v303, %v411
    %v413 = vpop.f32.mrb[0].mxu0
    %414 = vdwg.mxu0
    %v415 = vld [vmem:[%s5] sm:$0x1]
    %v417 = vlaneseq
    %v418 = vshrl.u32 %v417, 7
    %v419 = vsub.s32 0, %v418
    %v420 = vrot.slane %v415, %v419
    %v422 = vadd.f32 %v401, %v420
    %v423 = vadd.f32 %v404, %v420
    %v424 = vadd.f32 %v409, %v420
    %v425 = vadd.f32 %v412, %v420
    %vm426 = vcmp.lt.s32.totalorder %v40, 32
    %427 = vadd.xlane.f32.xlu0 %v422
    %v428 = vpop.xlane.xlu0 %427
    %429 = vadd.xlane.f32.xlu0 %v423
    %v430 = vpop.xlane.xlu0 %429
    %431 = vadd.xlane.f32.xlu0 %v424
    %v432 = vpop.xlane.xlu0 %431
    %433 = vadd.xlane.f32.xlu0 %v425
    %v434 = vpop.xlane.xlu0 %433
    %v435 = vrcp.pop 32.0
    %v436 = vmul.f32 %v428, %v435
    %v437 = vmul.f32 %v430, %v435
    %v438 = vmul.f32 %v432, %v435
    %v439 = vmul.f32 %v434, %v435
    %v440 = vsub.f32 %v422, %v436
    %v441 = vsub.f32 %v423, %v437
    %v442 = vsub.f32 %v424, %v438
    %v443 = vsub.f32 %v425, %v439
    %v444 = vsel %vm426, 1, 0
    %vm445 = vcmp.eq.s32.totalorder %v444, 1
    %v446 = vsel %vm445, %v440, 0.0
    %v447 = vsel %vm445, %v441, 0.0
    %v448 = vsel %vm445, %v442, 0.0
    %v449 = vsel %vm445, %v443, 0.0
    %v450 = vmul.f32 %v446, %v446
    %v451 = vmul.f32 %v447, %v447
    %v452 = vmul.f32 %v448, %v448
    %v453 = vmul.f32 %v449, %v449
    %454 = vadd.xlane.f32.xlu0 %v450
    %v455 = vpop.xlane.xlu0 %454
    %456 = vadd.xlane.f32.xlu0 %v451
    %v457 = vpop.xlane.xlu0 %456
    %458 = vadd.xlane.f32.xlu0 %v452
    %v459 = vpop.xlane.xlu0 %458
    %460 = vadd.xlane.f32.xlu0 %v453
    %v461 = vpop.xlane.xlu0 %460
    %v462 = vmul.f32 %v455, %v435
    %v463 = vmul.f32 %v457, %v435
    %v464 = vmul.f32 %v459, %v435
    %v465 = vmul.f32 %v461, %v435
    %v466 = vadd.f32 %v462, 1e-05
    %v467 = vadd.f32 %v463, 1e-05
    %v468 = vadd.f32 %v464, 1e-05
    %v469 = vadd.f32 %v465, 1e-05
    %v470 = vrsqrt.pop %v466
    %v471 = vrsqrt.pop %v467
    %v472 = vrsqrt.pop %v468
    %v473 = vrsqrt.pop %v469
    %v474 = vmul.f32 %v446, %v470
    %v475 = vmul.f32 %v447, %v471
    %v476 = vmul.f32 %v448, %v472
    %v477 = vmul.f32 %v449, %v473
    %v478 = vld [vmem:[%s6] sm:$0x1]
    %v480 = vlaneseq
    %v481 = vshrl.u32 %v480, 7
    %v482 = vsub.s32 0, %v481
    %v483 = vrot.slane %v478, %v482
    %v485 = vmul.f32 %v474, %v483
    %v486 = vmul.f32 %v475, %v483
    %v487 = vmul.f32 %v476, %v483
    %v488 = vmul.f32 %v477, %v483
    %v489 = vld [vmem:[%s7] sm:$0x1]
    %v491 = vlaneseq
    %v492 = vshrl.u32 %v491, 7
    %v493 = vsub.s32 0, %v492
    %v494 = vrot.slane %v489, %v493
    %v496 = vadd.f32 %v485, %v494
    %v497 = vadd.f32 %v486, %v494
    %v498 = vadd.f32 %v487, %v494
    %v499 = vadd.f32 %v488, %v494
    %v500 = vmax.f32 %v496, 0.0
    %v501 = vmax.f32 %v497, 0.0
    %v502 = vmax.f32 %v498, 0.0
    %v503 = vmax.f32 %v499, 0.0
    %v504 = vpack.c.bf16 %v501, %v500
    %v505 = vpack.c.bf16 %v503, %v502
    %506 = vst [vmem:[#allocation2] sm:$0xff] %v504
    %507 = vst [vmem:[#allocation2 + $0x8] sm:$0xff] %v505
    %v508 = vld [vmem:[#allocation2] sm:$0xff]
    %v509 = vld [vmem:[#allocation2 + $0x8] sm:$0xff]
    %v510 = vld [vmem:[#allocation2 + $0x10] sm:$0xff]
    %v511 = vld [vmem:[#allocation2 + $0x18] sm:$0xff]
    %v512 = vld [vmem:[#allocation2 + $0x20] sm:$0xff]
    %v513 = vld [vmem:[#allocation2 + $0x28] sm:$0xff]
    %v514 = vld [vmem:[#allocation2 + $0x30] sm:$0xff]
    %v515 = vld [vmem:[#allocation2 + $0x38] sm:$0xff]
    %v516 = vld [vmem:[#allocation2] sm:$0xff]
    %v517 = vld [vmem:[%s2] sm:$0xf]
    %v518 = vld [vmem:[%s2 + $0x4] sm:$0xf]
    %v521 = vunpack.c.l.b16 %v517
    %v522 = vunpack.c.l.b16 %v518
    %v523 = vpack.c.b16 %v522, %v521
    %525 = vmatprep.subr.bf16.mxu0 0
    %526 = vmatpush1.bf16.msra.mxu0 %v508
    %527 = vmatprep.subr.bf16.mxu0 0
    %528 = vmatpush1.bf16.msra.mxu0 %v509
    %529 = vmatprep.subr.bf16.mxu0 0
    %530 = vmatpush1.bf16.msra.mxu0 %v510
    %531 = vmatprep.subr.bf16.mxu0 0
    %532 = vmatpush1.bf16.msra.mxu0 %v511
    %533 = vmatprep.subr.bf16.mxu0 0
    %534 = vmatpush1.bf16.msra.mxu0 %v512
    %535 = vmatprep.subr.bf16.mxu0 0
    %536 = vmatpush1.bf16.msra.mxu0 %v513
    %537 = vmatprep.subr.bf16.mxu0 0
    %538 = vmatpush1.bf16.msra.mxu0 %v514
    %539 = vmatprep.subr.bf16.mxu0 0
    %540 = vmatpush1.bf16.msra.mxu0 %v515
    %541 = vmatprep.subr.bf16.mxu0 0
    %542 = vmatpush1.bf16.msra.mxu0 0
    %543 = vmatprep.subr.bf16.mxu0 0
    %544 = vmatpush1.bf16.msra.mxu0 0
    %545 = vmatprep.subr.bf16.mxu0 0
    %546 = vmatpush1.bf16.msra.mxu0 0
    %547 = vmatprep.subr.bf16.mxu0 0
    %548 = vmatpush1.bf16.msra.mxu0 0
    %549 = vmatprep.subr.bf16.mxu0 0
    %550 = vmatpush1.bf16.msra.mxu0 0
    %551 = vmatprep.subr.bf16.mxu0 0
    %552 = vmatpush1.bf16.msra.mxu0 0
    %553 = vmatprep.subr.bf16.mxu0 0
    %554 = vmatpush1.bf16.msra.mxu0 0
    %555 = vmatprep.subr.bf16.mxu0 0
    %556 = vmatpush1.bf16.msra.mxu0 0
    %557 = vmatprep.mubr.bf16.mxu0 0
    %558 = vmatmul.mubr.bf16.gmra.mrb[0].mxu0 %v523
    %v559 = vpop.f32.mrb[0].mxu0
    %v560 = vadd.f32 0.0, %v559
    %v561 = vpop.f32.mrb[0].mxu0
    %v562 = vpop.f32.mrb[0].mxu0
    %v563 = vadd.f32 0.0, %v562
    %v564 = vpop.f32.mrb[0].mxu0
    %565 = vdwg.mxu0
    %s566 = scalar_lea.vmem %s4, 128
    %v567 = vld [vmem:[%s566] sm:$0xf]
    %v568 = vld [vmem:[%s566 + $0x4] sm:$0xf]
    %v569 = vld [vmem:[%s566 + $0x8] sm:$0xf]
    %v570 = vld [vmem:[%s566 + $0xc] sm:$0xf]
    %v571 = vld [vmem:[%s566 + $0x10] sm:$0xf]
    %v572 = vld [vmem:[%s566 + $0x14] sm:$0xf]
    %v573 = vld [vmem:[%s566 + $0x18] sm:$0xf]
    %v574 = vld [vmem:[%s566 + $0x1c] sm:$0xf]
    %v575 = vld [vmem:[%s566 + $0x20] sm:$0xf]
    %v576 = vld [vmem:[%s566 + $0x24] sm:$0xf]
    %v577 = vld [vmem:[%s566 + $0x28] sm:$0xf]
    %v578 = vld [vmem:[%s566 + $0x2c] sm:$0xf]
    %v579 = vld [vmem:[%s566 + $0x30] sm:$0xf]
    %v580 = vld [vmem:[%s566 + $0x34] sm:$0xf]
    %v581 = vld [vmem:[%s566 + $0x38] sm:$0xf]
    %v582 = vld [vmem:[%s566 + $0x3c] sm:$0xf]
    %v583 = vpack.c.bf16 %v563, %v560
    %s584 = scalar_lea.vmem %s4, 192
    %v585 = vld [vmem:[%s584] sm:$0xf]
    %v586 = vld [vmem:[%s584 + $0x4] sm:$0xf]
    %v587 = vld [vmem:[%s584 + $0x8] sm:$0xf]
    %v588 = vld [vmem:[%s584 + $0xc] sm:$0xf]
    %v589 = vld [vmem:[%s584 + $0x10] sm:$0xf]
    %v590 = vld [vmem:[%s584 + $0x14] sm:$0xf]
    %v591 = vld [vmem:[%s584 + $0x18] sm:$0xf]
    %v592 = vld [vmem:[%s584 + $0x1c] sm:$0xf]
    %v593 = vld [vmem:[%s584 + $0x20] sm:$0xf]
    %v594 = vld [vmem:[%s584 + $0x24] sm:$0xf]
    %v595 = vld [vmem:[%s584 + $0x28] sm:$0xf]
    %v596 = vld [vmem:[%s584 + $0x2c] sm:$0xf]
    %v597 = vld [vmem:[%s584 + $0x30] sm:$0xf]
    %v598 = vld [vmem:[%s584 + $0x34] sm:$0xf]
    %v599 = vld [vmem:[%s584 + $0x38] sm:$0xf]
    %v600 = vld [vmem:[%s584 + $0x3c] sm:$0xf]
    %v617 = vunpack.c.l.b16 %v585
    %v618 = vunpack.c.l.b16 %v586
    %v619 = vunpack.c.l.b16 %v587
    %v620 = vunpack.c.l.b16 %v588
    %v621 = vunpack.c.l.b16 %v589
    %v622 = vunpack.c.l.b16 %v590
    %v623 = vunpack.c.l.b16 %v591
    %v624 = vunpack.c.l.b16 %v592
    %v625 = vunpack.c.l.b16 %v593
    %v626 = vunpack.c.l.b16 %v594
    %v627 = vunpack.c.l.b16 %v595
    %v628 = vunpack.c.l.b16 %v596
    %v629 = vunpack.c.l.b16 %v597
    %v630 = vunpack.c.l.b16 %v598
    %v631 = vunpack.c.l.b16 %v599
    %v632 = vunpack.c.l.b16 %v600
    %v633 = vpack.c.b16 %v618, %v617
    %v634 = vpack.c.b16 %v620, %v619
    %v635 = vpack.c.b16 %v622, %v621
    %v636 = vpack.c.b16 %v624, %v623
    %v637 = vpack.c.b16 %v626, %v625
    %v638 = vpack.c.b16 %v628, %v627
    %v639 = vpack.c.b16 %v630, %v629
    %v640 = vpack.c.b16 %v632, %v631
    %649 = vmatprep.subr.bf16.mxu0 0
    %650 = vmatpush1.bf16.msra.mxu0 %v633
    %651 = vmatprep.subr.bf16.mxu0 0
    %652 = vmatpush1.bf16.msra.mxu0 %v634
    %653 = vmatprep.subr.bf16.mxu0 0
    %654 = vmatpush1.bf16.msra.mxu0 %v635
    %655 = vmatprep.subr.bf16.mxu0 0
    %656 = vmatpush1.bf16.msra.mxu0 %v636
    %657 = vmatprep.subr.bf16.mxu0 0
    %658 = vmatpush1.bf16.msra.mxu0 %v637
    %659 = vmatprep.subr.bf16.mxu0 0
    %660 = vmatpush1.bf16.msra.mxu0 %v638
    %661 = vmatprep.subr.bf16.mxu0 0
    %662 = vmatpush1.bf16.msra.mxu0 %v639
    %663 = vmatprep.subr.bf16.mxu0 0
    %664 = vmatpush1.bf16.msra.mxu0 %v640
    %665 = vmatprep.subr.bf16.mxu0 0
    %666 = vmatpush1.bf16.msra.mxu0 0
    %667 = vmatprep.subr.bf16.mxu0 0
    %668 = vmatpush1.bf16.msra.mxu0 0
    %669 = vmatprep.subr.bf16.mxu0 0
    %670 = vmatpush1.bf16.msra.mxu0 0
    %671 = vmatprep.subr.bf16.mxu0 0
    %672 = vmatpush1.bf16.msra.mxu0 0
    %673 = vmatprep.subr.bf16.mxu0 0
    %674 = vmatpush1.bf16.msra.mxu0 0
    %675 = vmatprep.subr.bf16.mxu0 0
    %676 = vmatpush1.bf16.msra.mxu0 0
    %677 = vmatprep.subr.bf16.mxu0 0
    %678 = vmatpush1.bf16.msra.mxu0 0
    %679 = vmatprep.subr.bf16.mxu0 0
    %680 = vmatpush1.bf16.msra.mxu0 0
    %681 = vmatprep.mubr.bf16.mxu0 0
    %682 = vmatmul.mubr.bf16.gmra.mrb[0].mxu0 %v583
    %v683 = vpop.f32.mrb[0].mxu0
    %v684 = vadd.f32 0.0, %v683
    %v685 = vpop.f32.mrb[0].mxu0
    %v686 = vpop.f32.mrb[0].mxu0
    %v687 = vadd.f32 0.0, %v686
    %v688 = vpop.f32.mrb[0].mxu0
    %689 = vdwg.mxu0
    %v706 = vunpack.c.l.b16 %v567
    %v707 = vunpack.c.l.b16 %v568
    %v708 = vunpack.c.l.b16 %v569
    %v709 = vunpack.c.l.b16 %v570
    %v710 = vunpack.c.l.b16 %v571
    %v711 = vunpack.c.l.b16 %v572
    %v712 = vunpack.c.l.b16 %v573
    %v713 = vunpack.c.l.b16 %v574
    %v714 = vunpack.c.l.b16 %v575
    %v715 = vunpack.c.l.b16 %v576
    %v716 = vunpack.c.l.b16 %v577
    %v717 = vunpack.c.l.b16 %v578
    %v718 = vunpack.c.l.b16 %v579
    %v719 = vunpack.c.l.b16 %v580
    %v720 = vunpack.c.l.b16 %v581
    %v721 = vunpack.c.l.b16 %v582
    %v722 = vpack.c.b16 %v707, %v706
    %v723 = vpack.c.b16 %v709, %v708
    %v724 = vpack.c.b16 %v711, %v710
    %v725 = vpack.c.b16 %v713, %v712
    %v726 = vpack.c.b16 %v715, %v714
    %v727 = vpack.c.b16 %v717, %v716
    %v728 = vpack.c.b16 %v719, %v718
    %v729 = vpack.c.b16 %v721, %v720
    %738 = vmatprep.subr.bf16.mxu0 0
    %739 = vmatpush1.bf16.msra.mxu0 %v722
    %740 = vmatprep.subr.bf16.mxu0 0
    %741 = vmatpush1.bf16.msra.mxu0 %v723
    %742 = vmatprep.subr.bf16.mxu0 0
    %743 = vmatpush1.bf16.msra.mxu0 %v724
    %744 = vmatprep.subr.bf16.mxu0 0
    %745 = vmatpush1.bf16.msra.mxu0 %v725
    %746 = vmatprep.subr.bf16.mxu0 0
    %747 = vmatpush1.bf16.msra.mxu0 %v726
    %748 = vmatprep.subr.bf16.mxu0 0
    %749 = vmatpush1.bf16.msra.mxu0 %v727
    %750 = vmatprep.subr.bf16.mxu0 0
    %751 = vmatpush1.bf16.msra.mxu0 %v728
    %752 = vmatprep.subr.bf16.mxu0 0
    %753 = vmatpush1.bf16.msra.mxu0 %v729
    %754 = vmatprep.subr.bf16.mxu0 0
    %755 = vmatpush1.bf16.msra.mxu0 0
    %756 = vmatprep.subr.bf16.mxu0 0
    %757 = vmatpush1.bf16.msra.mxu0 0
    %758 = vmatprep.subr.bf16.mxu0 0
    %759 = vmatpush1.bf16.msra.mxu0 0
    %760 = vmatprep.subr.bf16.mxu0 0
    %761 = vmatpush1.bf16.msra.mxu0 0
    %762 = vmatprep.subr.bf16.mxu0 0
    %763 = vmatpush1.bf16.msra.mxu0 0
    %764 = vmatprep.subr.bf16.mxu0 0
    %765 = vmatpush1.bf16.msra.mxu0 0
    %766 = vmatprep.subr.bf16.mxu0 0
    %767 = vmatpush1.bf16.msra.mxu0 0
    %768 = vmatprep.subr.bf16.mxu0 0
    %769 = vmatpush1.bf16.msra.mxu0 0
    %770 = vmatprep.mubr.bf16.mxu0 0
    %771 = vmatmul.mubr.bf16.gmra.mrb[0].mxu0 %v516
    %v772 = vpop.f32.mrb[0].mxu0
    %v773 = vadd.f32 %v684, %v772
    %v774 = vpop.f32.mrb[0].mxu0
    %v775 = vpop.f32.mrb[0].mxu0
    %v776 = vadd.f32 %v687, %v775
    %v777 = vpop.f32.mrb[0].mxu0
    %778 = vdwg.mxu0
    %s779 = scalar_lea.vmem %s5, 1
    %v780 = vld [vmem:[%s779] sm:$0x1]
    %v782 = vlaneseq
    %v783 = vshrl.u32 %v782, 7
    %v784 = vsub.s32 0, %v783
    %v785 = vrot.slane %v780, %v784
    %v787 = vadd.f32 %v773, %v785
    %v788 = vadd.f32 %v776, %v785
    %789 = vadd.xlane.f32.xlu0 %v787
    %v790 = vpop.xlane.xlu0 %789
    %791 = vadd.xlane.f32.xlu0 %v788
    %v792 = vpop.xlane.xlu0 %791
    %v793 = vmul.f32 %v790, %v435
    %v794 = vmul.f32 %v792, %v435
    %v795 = vsub.f32 %v787, %v793
    %v796 = vsub.f32 %v788, %v794
    %v797 = vsel %vm445, %v795, 0.0
    %v798 = vsel %vm445, %v796, 0.0
    %v799 = vmul.f32 %v797, %v797
    %v800 = vmul.f32 %v798, %v798
    %801 = vadd.xlane.f32.xlu0 %v799
    %v802 = vpop.xlane.xlu0 %801
    %803 = vadd.xlane.f32.xlu0 %v800
    %v804 = vpop.xlane.xlu0 %803
    %v805 = vmul.f32 %v802, %v435
    %v806 = vmul.f32 %v804, %v435
    %v807 = vadd.f32 %v805, 1e-05
    %v808 = vadd.f32 %v806, 1e-05
    %v809 = vrsqrt.pop %v807
    %v810 = vrsqrt.pop %v808
    %v811 = vmul.f32 %v797, %v809
    %v812 = vmul.f32 %v798, %v810
    %s813 = scalar_lea.vmem %s6, 1
    %v814 = vld [vmem:[%s813] sm:$0x1]
    %v816 = vlaneseq
    %v817 = vshrl.u32 %v816, 7
    %v818 = vsub.s32 0, %v817
    %v819 = vrot.slane %v814, %v818
    %v821 = vmul.f32 %v811, %v819
    %v822 = vmul.f32 %v812, %v819
    %s823 = scalar_lea.vmem %s7, 1
    %v824 = vld [vmem:[%s823] sm:$0x1]
    %v826 = vlaneseq
    %v827 = vshrl.u32 %v826, 7
    %v828 = vsub.s32 0, %v827
    %v829 = vrot.slane %v824, %v828
    %v831 = vadd.f32 %v821, %v829
    %v832 = vadd.f32 %v822, %v829
    %v833 = vmax.f32 %v831, 0.0
    %v834 = vmax.f32 %v832, 0.0
    %v835 = vpack.c.bf16 %v834, %v833
    %836 = vst [vmem:[#allocation2] sm:$0xff] %v835
    %v837 = vld [vmem:[#allocation2] sm:$0xff]
    %v838 = vld [vmem:[#allocation2 + $0x8] sm:$0xff]
    %v839 = vld [vmem:[#allocation2 + $0x10] sm:$0xff]
    %v840 = vld [vmem:[#allocation2 + $0x18] sm:$0xff]
    %v841 = vld [vmem:[#allocation2 + $0x20] sm:$0xff]
    %v842 = vld [vmem:[#allocation2 + $0x28] sm:$0xff]
    %v843 = vld [vmem:[#allocation2 + $0x30] sm:$0xff]
    %v844 = vld [vmem:[#allocation2 + $0x38] sm:$0xff]
    %v845 = vld [vmem:[#allocation2] sm:$0xf]
    %v846 = vld [vmem:[%s3] sm:$0xf]
    %847 = vmatprep.subr.bf16.mxu0 0
    %848 = vmatpush1.bf16.msra.mxu0 %v837
    %849 = vmatprep.subr.bf16.mxu0 0
    %850 = vmatpush1.bf16.msra.mxu0 %v838
    %851 = vmatprep.subr.bf16.mxu0 0
    %852 = vmatpush1.bf16.msra.mxu0 %v839
    %853 = vmatprep.subr.bf16.mxu0 0
    %854 = vmatpush1.bf16.msra.mxu0 %v840
    %855 = vmatprep.subr.bf16.mxu0 0
    %856 = vmatpush1.bf16.msra.mxu0 %v841
    %857 = vmatprep.subr.bf16.mxu0 0
    %858 = vmatpush1.bf16.msra.mxu0 %v842
    %859 = vmatprep.subr.bf16.mxu0 0
    %860 = vmatpush1.bf16.msra.mxu0 %v843
    %861 = vmatprep.subr.bf16.mxu0 0
    %862 = vmatpush1.bf16.msra.mxu0 %v844
    %863 = vmatprep.subr.bf16.mxu0 0
    %864 = vmatpush1.bf16.msra.mxu0 0
    %865 = vmatprep.subr.bf16.mxu0 0
    %866 = vmatpush1.bf16.msra.mxu0 0
    %867 = vmatprep.subr.bf16.mxu0 0
    %868 = vmatpush1.bf16.msra.mxu0 0
    %869 = vmatprep.subr.bf16.mxu0 0
    %870 = vmatpush1.bf16.msra.mxu0 0
    %871 = vmatprep.subr.bf16.mxu0 0
    %872 = vmatpush1.bf16.msra.mxu0 0
    %873 = vmatprep.subr.bf16.mxu0 0
    %874 = vmatpush1.bf16.msra.mxu0 0
    %875 = vmatprep.subr.bf16.mxu0 0
    %876 = vmatpush1.bf16.msra.mxu0 0
    %877 = vmatprep.subr.bf16.mxu0 0
    %878 = vmatpush1.bf16.msra.mxu0 0
    %879 = vmatprep.mubr.bf16.mxu0 0
    %880 = vmatmul.mubr.bf16.gmra.mrb[0].mxu0 %v846
    %v881 = vpop.f32.mrb[0].mxu0
    %v882 = vadd.f32 0.0, %v881
    %v883 = vpop.f32.mrb[0].mxu0
    %v884 = vpop.f32.mrb[0].mxu0
    %v885 = vpop.f32.mrb[0].mxu0
    %886 = vdwg.mxu0
    %s887 = scalar_lea.vmem %s4, 256
    %v888 = vld [vmem:[%s887] sm:$0xf]
    %v889 = vld [vmem:[%s887 + $0x4] sm:$0xf]
    %v890 = vld [vmem:[%s887 + $0x8] sm:$0xf]
    %v891 = vld [vmem:[%s887 + $0xc] sm:$0xf]
    %v892 = vld [vmem:[%s887 + $0x10] sm:$0xf]
    %v893 = vld [vmem:[%s887 + $0x14] sm:$0xf]
    %v894 = vld [vmem:[%s887 + $0x18] sm:$0xf]
    %v895 = vld [vmem:[%s887 + $0x1c] sm:$0xf]
    %v896 = vld [vmem:[%s887 + $0x20] sm:$0xf]
    %v897 = vld [vmem:[%s887 + $0x24] sm:$0xf]
    %v898 = vld [vmem:[%s887 + $0x28] sm:$0xf]
    %v899 = vld [vmem:[%s887 + $0x2c] sm:$0xf]
    %v900 = vld [vmem:[%s887 + $0x30] sm:$0xf]
    %v901 = vld [vmem:[%s887 + $0x34] sm:$0xf]
    %v902 = vld [vmem:[%s887 + $0x38] sm:$0xf]
    %v903 = vld [vmem:[%s887 + $0x3c] sm:$0xf]
    %v904 = vpack.c.bf16 %v882, %v882
    %s905 = scalar_lea.vmem %s4, 320
    %v906 = vld [vmem:[%s905] sm:$0xf]
    %v907 = vld [vmem:[%s905 + $0x4] sm:$0xf]
    %v908 = vld [vmem:[%s905 + $0x8] sm:$0xf]
    %v909 = vld [vmem:[%s905 + $0xc] sm:$0xf]
    %v910 = vld [vmem:[%s905 + $0x10] sm:$0xf]
    %v911 = vld [vmem:[%s905 + $0x14] sm:$0xf]
    %v912 = vld [vmem:[%s905 + $0x18] sm:$0xf]
    %v913 = vld [vmem:[%s905 + $0x1c] sm:$0xf]
    %v914 = vld [vmem:[%s905 + $0x20] sm:$0xf]
    %v915 = vld [vmem:[%s905 + $0x24] sm:$0xf]
    %v916 = vld [vmem:[%s905 + $0x28] sm:$0xf]
    %v917 = vld [vmem:[%s905 + $0x2c] sm:$0xf]
    %v918 = vld [vmem:[%s905 + $0x30] sm:$0xf]
    %v919 = vld [vmem:[%s905 + $0x34] sm:$0xf]
    %v920 = vld [vmem:[%s905 + $0x38] sm:$0xf]
    %v921 = vld [vmem:[%s905 + $0x3c] sm:$0xf]
    %v938 = vunpack.c.l.b16 %v906
    %v939 = vunpack.c.l.b16 %v907
    %v940 = vunpack.c.l.b16 %v908
    %v941 = vunpack.c.l.b16 %v909
    %v942 = vunpack.c.l.b16 %v910
    %v943 = vunpack.c.l.b16 %v911
    %v944 = vunpack.c.l.b16 %v912
    %v945 = vunpack.c.l.b16 %v913
    %v946 = vunpack.c.l.b16 %v914
    %v947 = vunpack.c.l.b16 %v915
    %v948 = vunpack.c.l.b16 %v916
    %v949 = vunpack.c.l.b16 %v917
    %v950 = vunpack.c.l.b16 %v918
    %v951 = vunpack.c.l.b16 %v919
    %v952 = vunpack.c.l.b16 %v920
    %v953 = vunpack.c.l.b16 %v921
    %v954 = vpack.c.b16 %v939, %v938
    %v955 = vpack.c.b16 %v941, %v940
    %v956 = vpack.c.b16 %v943, %v942
    %v957 = vpack.c.b16 %v945, %v944
    %v958 = vpack.c.b16 %v947, %v946
    %v959 = vpack.c.b16 %v949, %v948
    %v960 = vpack.c.b16 %v951, %v950
    %v961 = vpack.c.b16 %v953, %v952
    %970 = vmatprep.subr.bf16.mxu0 0
    %971 = vmatpush1.bf16.msra.mxu0 %v954
    %972 = vmatprep.subr.bf16.mxu0 0
    %973 = vmatpush1.bf16.msra.mxu0 %v955
    %974 = vmatprep.subr.bf16.mxu0 0
    %975 = vmatpush1.bf16.msra.mxu0 %v956
    %976 = vmatprep.subr.bf16.mxu0 0
    %977 = vmatpush1.bf16.msra.mxu0 %v957
    %978 = vmatprep.subr.bf16.mxu0 0
    %979 = vmatpush1.bf16.msra.mxu0 %v958
    %980 = vmatprep.subr.bf16.mxu0 0
    %981 = vmatpush1.bf16.msra.mxu0 %v959
    %982 = vmatprep.subr.bf16.mxu0 0
    %983 = vmatpush1.bf16.msra.mxu0 %v960
    %984 = vmatprep.subr.bf16.mxu0 0
    %985 = vmatpush1.bf16.msra.mxu0 %v961
    %986 = vmatprep.subr.bf16.mxu0 0
    %987 = vmatpush1.bf16.msra.mxu0 0
    %988 = vmatprep.subr.bf16.mxu0 0
    %989 = vmatpush1.bf16.msra.mxu0 0
    %990 = vmatprep.subr.bf16.mxu0 0
    %991 = vmatpush1.bf16.msra.mxu0 0
    %992 = vmatprep.subr.bf16.mxu0 0
    %993 = vmatpush1.bf16.msra.mxu0 0
    %994 = vmatprep.subr.bf16.mxu0 0
    %995 = vmatpush1.bf16.msra.mxu0 0
    %996 = vmatprep.subr.bf16.mxu0 0
    %997 = vmatpush1.bf16.msra.mxu0 0
    %998 = vmatprep.subr.bf16.mxu0 0
    %999 = vmatpush1.bf16.msra.mxu0 0
    %1000 = vmatprep.subr.bf16.mxu0 0
    %1001 = vmatpush1.bf16.msra.mxu0 0
    %1002 = vmatprep.mubr.bf16.mxu0 0
    %1003 = vmatmul.mubr.bf16.gmra.mrb[0].mxu0 %v904
    %v1004 = vpop.f32.mrb[0].mxu0
    %v1005 = vadd.f32 0.0, %v1004
    %v1006 = vpop.f32.mrb[0].mxu0
    %v1007 = vpop.f32.mrb[0].mxu0
    %v1008 = vpop.f32.mrb[0].mxu0
    %1009 = vdwg.mxu0
    %v1026 = vunpack.c.l.b16 %v888
    %v1027 = vunpack.c.l.b16 %v889
    %v1028 = vunpack.c.l.b16 %v890
    %v1029 = vunpack.c.l.b16 %v891
    %v1030 = vunpack.c.l.b16 %v892
    %v1031 = vunpack.c.l.b16 %v893
    %v1032 = vunpack.c.l.b16 %v894
    %v1033 = vunpack.c.l.b16 %v895
    %v1034 = vunpack.c.l.b16 %v896
    %v1035 = vunpack.c.l.b16 %v897
    %v1036 = vunpack.c.l.b16 %v898
    %v1037 = vunpack.c.l.b16 %v899
    %v1038 = vunpack.c.l.b16 %v900
    %v1039 = vunpack.c.l.b16 %v901
    %v1040 = vunpack.c.l.b16 %v902
    %v1041 = vunpack.c.l.b16 %v903
    %v1042 = vpack.c.b16 %v1027, %v1026
    %v1043 = vpack.c.b16 %v1029, %v1028
    %v1044 = vpack.c.b16 %v1031, %v1030
    %v1045 = vpack.c.b16 %v1033, %v1032
    %v1046 = vpack.c.b16 %v1035, %v1034
    %v1047 = vpack.c.b16 %v1037, %v1036
    %v1048 = vpack.c.b16 %v1039, %v1038
    %v1049 = vpack.c.b16 %v1041, %v1040
    %1058 = vmatprep.subr.bf16.mxu0 0
    %1059 = vmatpush1.bf16.msra.mxu0 %v1042
    %1060 = vmatprep.subr.bf16.mxu0 0
    %1061 = vmatpush1.bf16.msra.mxu0 %v1043
    %1062 = vmatprep.subr.bf16.mxu0 0
    %1063 = vmatpush1.bf16.msra.mxu0 %v1044
    %1064 = vmatprep.subr.bf16.mxu0 0
    %1065 = vmatpush1.bf16.msra.mxu0 %v1045
    %1066 = vmatprep.subr.bf16.mxu0 0
    %1067 = vmatpush1.bf16.msra.mxu0 %v1046
    %1068 = vmatprep.subr.bf16.mxu0 0
    %1069 = vmatpush1.bf16.msra.mxu0 %v1047
    %1070 = vmatprep.subr.bf16.mxu0 0
    %1071 = vmatpush1.bf16.msra.mxu0 %v1048
    %1072 = vmatprep.subr.bf16.mxu0 0
    %1073 = vmatpush1.bf16.msra.mxu0 %v1049
    %1074 = vmatprep.subr.bf16.mxu0 0
    %1075 = vmatpush1.bf16.msra.mxu0 0
    %1076 = vmatprep.subr.bf16.mxu0 0
    %1077 = vmatpush1.bf16.msra.mxu0 0
    %1078 = vmatprep.subr.bf16.mxu0 0
    %1079 = vmatpush1.bf16.msra.mxu0 0
    %1080 = vmatprep.subr.bf16.mxu0 0
    %1081 = vmatpush1.bf16.msra.mxu0 0
    %1082 = vmatprep.subr.bf16.mxu0 0
    %1083 = vmatpush1.bf16.msra.mxu0 0
    %1084 = vmatprep.subr.bf16.mxu0 0
    %1085 = vmatpush1.bf16.msra.mxu0 0
    %1086 = vmatprep.subr.bf16.mxu0 0
    %1087 = vmatpush1.bf16.msra.mxu0 0
    %1088 = vmatprep.subr.bf16.mxu0 0
    %1089 = vmatpush1.bf16.msra.mxu0 0
    %1090 = vmatprep.mubr.bf16.mxu0 0
    %1091 = vmatmul.mubr.bf16.gmra.mrb[0].mxu0 %v845
    %v1092 = vpop.f32.mrb[0].mxu0
    %v1093 = vadd.f32 %v1005, %v1092
    %v1094 = vpop.f32.mrb[0].mxu0
    %v1095 = vpop.f32.mrb[0].mxu0
    %v1096 = vpop.f32.mrb[0].mxu0
    %1097 = vdwg.mxu0
    %s1098 = scalar_lea.vmem %s5, 2
    %v1099 = vld [vmem:[%s1098] sm:$0x1]
    %v1101 = vlaneseq
    %v1102 = vshrl.u32 %v1101, 7
    %v1103 = vsub.s32 0, %v1102
    %v1104 = vrot.slane %v1099, %v1103
    %v1106 = vadd.f32 %v1093, %v1104
    %1107 = vst [vmem:[#allocation3] sm:$0xff] %v1106
    // Predicated region
    $region34: #{sage_model_forward.1} parent=1 // pred_check
      _
    $region35: #{sage_model_forward.1} parent=1 // pred_check_branch
      %1109 = sbr.rel (0) target = $region37
    $region36: #{sage_model_forward.1} parent=1 // pred_region
      %s1111 = ssub.s32 128, 128
      %1112 = vsyncadd [#allocation4], %s1111
      %s1114 = sshll.u32 [#allocation3], 4
      %s1115 = int_to_ptr.vmem [resolvable:$true] %s1114
      %1117 = dma.vmem_to_hbm [thread:$0]  %s1115, 128, %s8, [#allocation4]
    $region37: #{sage_model_forward.1} parent=1 // pred_fallthru
      _
    // Predicated region
    $region38: #{sage_model_forward.1} parent=1 // pred_check
      _
    $region39: #{sage_model_forward.1} parent=1 // pred_check_branch
      %1119 = sbr.rel (0) target = $region41
    $region40: #{sage_model_forward.1} parent=1 // pred_region
      %1120 = dma.done [#allocation4], 128
    $region41: #{sage_model_forward.1} parent=1 // pred_fallthru
      _
    %1121 = vsyncpa [#allocation4], 1

</llo_original>
